<compile_context>
chip_gen: v6e
topology: v6e:2x2x1
jax: 0.10.0
libtpu: 0.0.40
codegen_flags: <defaults>
</compile_context>

<pallas_src>
import functools

import jax
import jax.numpy as jnp
from jax.experimental import pallas as pl
from jax.experimental.pallas import tpu as pltpu


def _mlp_kernel(xT_ref, w1t_ref, b1_ref, w2t_ref, b2_ref, w3t_ref, b3_ref, oT_ref):
    """Fused transposed 3-layer MLP.

    xT tile: [F, blk] (batch on lanes).  Weights are [out, in], biases [out, 1].
    out.T = W3t @ tanh(W2t @ tanh(W1t @ x.T + b1) + b2) + b3
    """
    xT = xT_ref[...]                                                     # [F,  blk]
    h1 = jnp.tanh(
        jnp.dot(w1t_ref[...], xT, preferred_element_type=jnp.float32) + b1_ref[...]
    )                                                                    # [H1, blk]
    h2 = jnp.tanh(
        jnp.dot(w2t_ref[...], h1, preferred_element_type=jnp.float32) + b2_ref[...]
    )                                                                    # [H2, blk]
    oT_ref[...] = (
        jnp.dot(w3t_ref[...], h2, preferred_element_type=jnp.float32) + b3_ref[...]
    ).astype(oT_ref.dtype)                                               # [O,  blk]


def _round_up(x, m):
    return (x + m - 1) // m * m


@functools.partial(jax.jit, static_argnames=("block_n",))
def mlp_forward(x, w1, b1, w2, b2, w3, b3, *, block_n=2048):
    """x: [N, F] float32, weights stored [in, out] (== torch W.T).  Returns [N, n_out]."""
    n, f = x.shape
    h1 = w1.shape[1]
    h2 = w2.shape[1]
    n_out = w3.shape[1]

    # Clamp the lane tile for small batches; keep it a multiple of 128 lanes.
    blk = min(block_n, _round_up(n, 128))
    n_pad = _round_up(n, blk)
    grid = (n_pad // blk,)

    # Lane-dense layout: batch along the last (lane) dim.  Pure layout plumbing
    # in the wrapper (tiny arrays / one transpose), no extra in-kernel work.
    xT = jnp.pad(x, ((0, n_pad - n), (0, 0))).T          # [F, n_pad]
    w1t, w2t, w3t = w1.T, w2.T, w3.T                     # [out, in]
    b1c, b2c, b3c = b1.reshape(-1, 1), b2.reshape(-1, 1), b3.reshape(-1, 1)

    # Constant index_map -> weight/bias blocks stay resident in VMEM across grid.
    full = lambda shape: pl.BlockSpec(shape, lambda i: (0, 0))

    flops = 2 * n_pad * (f * h1 + h1 * h2 + h2 * n_out)
    transcendentals = n_pad * (h1 + h2)
    bytes_accessed = 4 * (
        n_pad * (f + n_out) + f * h1 + h1 * h2 + h2 * n_out + h1 + h2 + n_out
    )
    cost = pl.CostEstimate(
        flops=int(flops),
        transcendentals=int(transcendentals),
        bytes_accessed=int(bytes_accessed),
    )

    oT = pl.pallas_call(
        _mlp_kernel,
        out_shape=jax.ShapeDtypeStruct((n_out, n_pad), jnp.float32),
        grid_spec=pltpu.PrefetchScalarGridSpec(
            num_scalar_prefetch=0,
            grid=grid,
            in_specs=[
                pl.BlockSpec((f, blk), lambda i: (0, i)),   # x.T : tiled along lanes
                full((h1, f)),
                full((h1, 1)),
                full((h2, h1)),
                full((h2, 1)),
                full((n_out, h2)),
                full((n_out, 1)),
            ],
            out_specs=pl.BlockSpec((n_out, blk), lambda i: (0, i)),
        ),
        compiler_params=pltpu.CompilerParams(
            dimension_semantics=("parallel",),   # v7x: shard batch tiles across 2 TCs
        ),
        cost_estimate=cost,
    )(xT, w1t, b1c, w2t, b2c, w3t, b3c)

    return oT[:, :n].T                                   # [N, n_out]


def init_params(key, n_feature, n_hidden_1, n_hidden_2, n_output):
    """Mirror the PyTorch module init: xavier_uniform weights, bias = 0.01,
    invRe = |N(1e-5, 1e-5)| (unused in forward)."""
    keys = jax.random.split(key, 4)

    def xavier(k, fan_in, fan_out):
        bound = jnp.sqrt(6.0 / (fan_in + fan_out))
        # stored as [in, out] (transpose of torch's [out, in]); same math.
        return jax.random.uniform(
            k, (fan_in, fan_out), jnp.float32, minval=-bound, maxval=bound
        )

    w1 = xavier(keys[0], n_feature, n_hidden_1)
    b1 = jnp.full((1, n_hidden_1), 0.01, jnp.float32)
    w2 = xavier(keys[1], n_hidden_1, n_hidden_2)
    b2 = jnp.full((1, n_hidden_2), 0.01, jnp.float32)
    w3 = xavier(keys[2], n_hidden_2, n_output)
    b3 = jnp.full((1, n_output), 0.01, jnp.float32)
    inv_re = jnp.abs(1e-5 + 1e-5 * jax.random.normal(keys[3], (), jnp.float32))
    return (w1, b1, w2, b2, w3, b3), inv_re


def mlp_reference(x, w1, b1, w2, b2, w3, b3):
    h1 = jnp.tanh(x @ w1 + b1)
    h2 = jnp.tanh(h1 @ w2 + b2)
    return h2 @ w3 + b3


if __name__ == "__main__":
    # 3D Navier-Stokes style PINN shapes: inputs (x, y, z, t), outputs (u, v, w, p)
    n_feature, n_hidden_1, n_hidden_2, n_output = 4, 32, 32, 4

    key = jax.random.PRNGKey(0)
    k_param, k_x1, k_x2 = jax.random.split(key, 3)
    (w1, b1, w2, b2, w3, b3), inv_re = init_params(
        k_param, n_feature, n_hidden_1, n_hidden_2, n_output
    )

    # Small batch: padded internally to a single 128-lane tile.
    x_small = jax.random.normal(k_x1, (8, n_feature), jnp.float32)
    out_small = jax.block_until_ready(
        mlp_forward(x_small, w1, b1, w2, b2, w3, b3)
    )
    ref_small = mlp_reference(x_small, w1, b1, w2, b2, w3, b3)
    assert out_small.shape == (8, n_output)
    assert jnp.allclose(out_small, ref_small, atol=1e-5, rtol=1e-5), "mismatch (small)"

    # Non-multiple batch: exercises padding + a multi-step (grid=3) pipeline.
    x_big = jax.random.normal(k_x2, (300, n_feature), jnp.float32)
    out_big = jax.block_until_ready(
        mlp_forward(x_big, w1, b1, w2, b2, w3, b3, block_n=128)
    )
    ref_big = mlp_reference(x_big, w1, b1, w2, b2, w3, b3)
    assert out_big.shape == (300, n_output)
    assert jnp.allclose(out_big, ref_big, atol=1e-5, rtol=1e-5), "mismatch (big)"

    print("KERNEL_OK")
</pallas_src>

<mosaic_0001>
module attributes {stable_mosaic.version = 11 : i64} {
  func.func @_mlp_kernel(%arg0: i32, %arg1: memref<4x128xf32, #tpu.memory_space<vmem>>, %arg2: memref<32x4xf32, #tpu.memory_space<vmem>>, %arg3: memref<32x1xf32, #tpu.memory_space<vmem>>, %arg4: memref<32x32xf32, #tpu.memory_space<vmem>>, %arg5: memref<32x1xf32, #tpu.memory_space<vmem>>, %arg6: memref<4x32xf32, #tpu.memory_space<vmem>>, %arg7: memref<4x1xf32, #tpu.memory_space<vmem>>, %arg8: memref<4x128xf32, #tpu.memory_space<vmem>>) attributes {dimension_semantics = [#tpu.dimension_semantics<parallel>], iteration_bounds = array<i64: 1>, scalar_prefetch = 0 : i64, scratch_operands = 0 : i64, tpu.core_type = #tpu.core_type<tc>, window_params = [{transform_indices = @transform_0, window_bounds = array<i64: 4, 128>}, {pipeline_mode = #tpu.pipeline_mode<synchronous>, transform_indices = @transform_1, window_bounds = array<i64: 32, 4>}, {pipeline_mode = #tpu.pipeline_mode<synchronous>, transform_indices = @transform_2, window_bounds = array<i64: 32, 1>}, {pipeline_mode = #tpu.pipeline_mode<synchronous>, transform_indices = @transform_3, window_bounds = array<i64: 32, 32>}, {pipeline_mode = #tpu.pipeline_mode<synchronous>, transform_indices = @transform_4, window_bounds = array<i64: 32, 1>}, {pipeline_mode = #tpu.pipeline_mode<synchronous>, transform_indices = @transform_5, window_bounds = array<i64: 4, 32>}, {pipeline_mode = #tpu.pipeline_mode<synchronous>, transform_indices = @transform_6, window_bounds = array<i64: 4, 1>}, {transform_indices = @transform_7, window_bounds = array<i64: 4, 128>}]} {
    %c0 = arith.constant 0 : index
    %c0_0 = arith.constant 0 : index
    %0 = vector.load %arg1[%c0, %c0_0] : memref<4x128xf32, #tpu.memory_space<vmem>>, vector<4x128xf32>
    %c0_1 = arith.constant 0 : index
    %c0_2 = arith.constant 0 : index
    %1 = vector.load %arg2[%c0_1, %c0_2] : memref<32x4xf32, #tpu.memory_space<vmem>>, vector<32x4xf32>
    %cst = arith.constant dense<0.000000e+00> : vector<32x128xf32>
    %2 = tpu.matmul %1, %0, %cst {dimension_numbers = #tpu.dot_dimension_numbers<[1], [0], [0], [1], [0, 0, 1, 1], [], []>} : vector<32x4xf32>, vector<4x128xf32>, vector<32x128xf32> -> vector<32x128xf32>
    %c0_3 = arith.constant 0 : index
    %c0_4 = arith.constant 0 : index
    %3 = vector.load %arg3[%c0_3, %c0_4] : memref<32x1xf32, #tpu.memory_space<vmem>>, vector<32x1xf32>
    %4 = vector.broadcast %3 : vector<32x1xf32> to vector<32x128xf32>
    %5 = arith.addf %2, %4 : vector<32x128xf32>
    %6 = math.tanh %5 : vector<32x128xf32>
    %c0_5 = arith.constant 0 : index
    %c0_6 = arith.constant 0 : index
    %7 = vector.load %arg4[%c0_5, %c0_6] : memref<32x32xf32, #tpu.memory_space<vmem>>, vector<32x32xf32>
    %cst_7 = arith.constant dense<0.000000e+00> : vector<32x128xf32>
    %8 = tpu.matmul %7, %6, %cst_7 {dimension_numbers = #tpu.dot_dimension_numbers<[1], [0], [0], [1], [0, 0, 1, 1], [], []>} : vector<32x32xf32>, vector<32x128xf32>, vector<32x128xf32> -> vector<32x128xf32>
    %c0_8 = arith.constant 0 : index
    %c0_9 = arith.constant 0 : index
    %9 = vector.load %arg5[%c0_8, %c0_9] : memref<32x1xf32, #tpu.memory_space<vmem>>, vector<32x1xf32>
    %10 = vector.broadcast %9 : vector<32x1xf32> to vector<32x128xf32>
    %11 = arith.addf %8, %10 : vector<32x128xf32>
    %12 = math.tanh %11 : vector<32x128xf32>
    %c0_10 = arith.constant 0 : index
    %c0_11 = arith.constant 0 : index
    %13 = vector.load %arg6[%c0_10, %c0_11] : memref<4x32xf32, #tpu.memory_space<vmem>>, vector<4x32xf32>
    %cst_12 = arith.constant dense<0.000000e+00> : vector<4x128xf32>
    %14 = tpu.matmul %13, %12, %cst_12 {dimension_numbers = #tpu.dot_dimension_numbers<[1], [0], [0], [1], [0, 0, 1, 1], [], []>} : vector<4x32xf32>, vector<32x128xf32>, vector<4x128xf32> -> vector<4x128xf32>
    %c0_13 = arith.constant 0 : index
    %c0_14 = arith.constant 0 : index
    %15 = vector.load %arg7[%c0_13, %c0_14] : memref<4x1xf32, #tpu.memory_space<vmem>>, vector<4x1xf32>
    %16 = vector.broadcast %15 : vector<4x1xf32> to vector<4x128xf32>
    %17 = arith.addf %14, %16 : vector<4x128xf32>
    %c0_15 = arith.constant 0 : index
    %c0_16 = arith.constant 0 : index
    %18 = vector.load %arg8[%c0_15, %c0_16] : memref<4x128xf32, #tpu.memory_space<vmem>>, vector<4x128xf32>
    tpu.vector_store %arg8[%c0_15, %c0_16], %17 {strides = array<i32>} : memref<4x128xf32, #tpu.memory_space<vmem>>, vector<4x128xf32>,
    return
  }
  func.func @transform_0(%arg0: i32) -> (i32, i32) {
    %c0_i32 = arith.constant 0 : i32
    %c0_i32_0 = arith.constant 0 : i32
    return %c0_i32, %arg0 : i32, i32
  }
  func.func @transform_1(%arg0: i32) -> (i32, i32) {
    %c0_i32 = arith.constant 0 : i32
    %c0_i32_0 = arith.constant 0 : i32
    %c0_i32_1 = arith.constant 0 : i32
    return %c0_i32, %c0_i32_0 : i32, i32
  }
  func.func @transform_2(%arg0: i32) -> (i32, i32) {
    %c0_i32 = arith.constant 0 : i32
    %c0_i32_0 = arith.constant 0 : i32
    %c0_i32_1 = arith.constant 0 : i32
    return %c0_i32, %c0_i32_0 : i32, i32
  }
  func.func @transform_3(%arg0: i32) -> (i32, i32) {
    %c0_i32 = arith.constant 0 : i32
    %c0_i32_0 = arith.constant 0 : i32
    %c0_i32_1 = arith.constant 0 : i32
    return %c0_i32, %c0_i32_0 : i32, i32
  }
  func.func @transform_4(%arg0: i32) -> (i32, i32) {
    %c0_i32 = arith.constant 0 : i32
    %c0_i32_0 = arith.constant 0 : i32
    %c0_i32_1 = arith.constant 0 : i32
    return %c0_i32, %c0_i32_0 : i32, i32
  }
  func.func @transform_5(%arg0: i32) -> (i32, i32) {
    %c0_i32 = arith.constant 0 : i32
    %c0_i32_0 = arith.constant 0 : i32
    %c0_i32_1 = arith.constant 0 : i32
    return %c0_i32, %c0_i32_0 : i32, i32
  }
  func.func @transform_6(%arg0: i32) -> (i32, i32) {
    %c0_i32 = arith.constant 0 : i32
    %c0_i32_0 = arith.constant 0 : i32
    %c0_i32_1 = arith.constant 0 : i32
    return %c0_i32, %c0_i32_0 : i32, i32
  }
  func.func @transform_7(%arg0: i32) -> (i32, i32) {
    %c0_i32 = arith.constant 0 : i32
    %c0_i32_0 = arith.constant 0 : i32
    return %c0_i32, %arg0 : i32, i32
  }
}

</mosaic_0001>

<llo_original>
// kernel: mlp_forward.1
$region0: #{mlp_forward.1}
  #allocation0 [shape = 'u32[]', space=smem, size = 0x4, offset = 0x4, fixed_abs, tag = 'smem constant byte address 0x4 - core index']
  #allocation1 [shape = 'u32[144,128]{1,0:T(1,128)}', space=vmem, size = 0x12000, scoped, tag = 'internal scratch']
  %s0 = inlined_call_operand.vmem [shape: f32[4,128], index: 0, kind: input, shape index: {}]
  %s1 = inlined_call_operand.vmem [shape: f32[32,4], index: 1, kind: input, shape index: {}]
  %s2 = inlined_call_operand.vmem [shape: f32[32,1], index: 2, kind: input, shape index: {}]
  %s3 = inlined_call_operand.vmem [shape: f32[32,32], index: 3, kind: input, shape index: {}]
  %s4 = inlined_call_operand.vmem [shape: f32[32,1], index: 4, kind: input, shape index: {}]
  %s5 = inlined_call_operand.vmem [shape: f32[4,32], index: 5, kind: input, shape index: {}]
  %s6 = inlined_call_operand.vmem [shape: f32[4,1], index: 6, kind: input, shape index: {}]
  %s7 = inlined_call_operand.vmem [shape: f32[4,128], index: 7, kind: output, shape index: {}]
  %s8 = sld [smem:[#allocation0]]
  $region38: #{mlp_forward.1} parent=0
    _
  %s10 = ssub.s32 1, %s8
  %s11 = scalar_select 0, %s10, %s8
  // Predicated region
  $region2: #{mlp_forward.1} parent=0 // pred_check
    _
  $region3: #{mlp_forward.1} parent=0 // pred_check_branch
    %13 = sbr.rel (0) target = $region5
  $region4: #{mlp_forward.1} parent=0 // pred_region
    _
  $region5: #{mlp_forward.1} parent=0 // pred_fallthru
    _
  // Predicated region
  $region6: #{mlp_forward.1} parent=0 // pred_check
    _
  $region7: #{mlp_forward.1} parent=0 // pred_check_branch
    %15 = sbr.rel (0) target = $region9
  $region8: #{mlp_forward.1} parent=0 // pred_region
    _
  $region9: #{mlp_forward.1} parent=0 // pred_fallthru
    _
  // Predicated region
  $region10: #{mlp_forward.1} parent=0 // pred_check
    _
  $region11: #{mlp_forward.1} parent=0 // pred_check_branch
    %17 = sbr.rel (0) target = $region13
  $region12: #{mlp_forward.1} parent=0 // pred_region
    _
  $region13: #{mlp_forward.1} parent=0 // pred_fallthru
    _
  // Predicated region
  $region14: #{mlp_forward.1} parent=0 // pred_check
    _
  $region15: #{mlp_forward.1} parent=0 // pred_check_branch
    %19 = sbr.rel (0) target = $region17
  $region16: #{mlp_forward.1} parent=0 // pred_region
    _
  $region17: #{mlp_forward.1} parent=0 // pred_fallthru
    _
  // Predicated region
  $region18: #{mlp_forward.1} parent=0 // pred_check
    _
  $region19: #{mlp_forward.1} parent=0 // pred_check_branch
    %21 = sbr.rel (0) target = $region21
  $region20: #{mlp_forward.1} parent=0 // pred_region
    _
  $region21: #{mlp_forward.1} parent=0 // pred_fallthru
    _
  // Predicated region
  $region22: #{mlp_forward.1} parent=0 // pred_check
    _
  $region23: #{mlp_forward.1} parent=0 // pred_check_branch
    %23 = sbr.rel (0) target = $region25
  $region24: #{mlp_forward.1} parent=0 // pred_region
    _
  $region25: #{mlp_forward.1} parent=0 // pred_fallthru
    _
  // Predicated region
  $region26: #{mlp_forward.1} parent=0 // pred_check
    _
  $region27: #{mlp_forward.1} parent=0 // pred_check_branch
    %25 = sbr.rel (0) target = $region29
  $region28: #{mlp_forward.1} parent=0 // pred_region
    _
  $region29: #{mlp_forward.1} parent=0 // pred_fallthru
    _
  %v26 = vld [vmem:[%s0] sm:$0xf]
  %v27 = vld [vmem:[%s1] sm:$0xff]
  %v28 = vld [vmem:[%s1 + $0x8] sm:$0xff]
  %v29 = vld [vmem:[%s1 + $0x10] sm:$0xff]
  %v30 = vld [vmem:[%s1 + $0x18] sm:$0xff]
  %v31 = vld [vmem:[%s2] sm:$0xff]
  %v32 = vld [vmem:[%s2 + $0x8] sm:$0xff]
  %v33 = vld [vmem:[%s2 + $0x10] sm:$0xff]
  %v34 = vld [vmem:[%s2 + $0x18] sm:$0xff]
  %36 = vset.pattern.permute.xlu0 0
  %37 = vperm.xlu0 %36, %v31
  %v38 = vpop.permute.xlu0 %37
  %41 = vset.pattern.permute.xlu0 0
  %42 = vperm.xlu0 %41, %v32
  %v43 = vpop.permute.xlu0 %42
  %46 = vset.pattern.permute.xlu0 0
  %47 = vperm.xlu0 %46, %v33
  %v48 = vpop.permute.xlu0 %47
  %51 = vset.pattern.permute.xlu0 0
  %52 = vperm.xlu0 %51, %v34
  %v53 = vpop.permute.xlu0 %52
  %vm55 = vcmask 31744
  %v57 = vsel %vm55, %v27, 0
  %v60 = vsel %vm55, %v28, 0
  %v63 = vsel %vm55, %v29, 0
  %v66 = vsel %vm55, %v30, 0
  %vm68 = vcmask 1043456
  %v70 = vsel %vm68, %v26, 0
  %72 = vmatprep.subr.mxu0 0.0
  %73 = vmatpush1.msra.mxu0 0.0
  %74 = vmatprep.subr.mxu0 0.0
  %75 = vmatpush1.msra.mxu0 0.0
  %76 = vmatprep.subr.mxu0 0.0
  %77 = vmatpush1.msra.mxu0 0.0
  %78 = vmatprep.subr.mxu0 0.0
  %79 = vmatpush1.msra.mxu0 0.0
  %80 = vmatprep.subr.mxu0 0.0
  %81 = vmatpush1.msra.mxu0 0.0
  %82 = vmatprep.subr.mxu0 0.0
  %83 = vmatpush1.msra.mxu0 0.0
  %84 = vmatprep.subr.mxu0 0.0
  %85 = vmatpush1.msra.mxu0 0.0
  %86 = vmatprep.subr.mxu0 0.0
  %87 = vmatpush1.msra.mxu0 0.0
  %88 = vmatprep.subr.mxu0 0.0
  %89 = vmatpush1.msra.mxu0 0.0
  %90 = vmatprep.subr.mxu0 0.0
  %91 = vmatpush1.msra.mxu0 0.0
  %92 = vmatprep.subr.mxu0 0.0
  %93 = vmatpush1.msra.mxu0 0.0
  %94 = vmatprep.subr.mxu0 0.0
  %95 = vmatpush1.msra.mxu0 0.0
  %96 = vmatprep.subr.mxu0 0.0
  %97 = vmatpush1.msra.mxu0 0.0
  %98 = vmatprep.subr.mxu0 0.0
  %99 = vmatpush1.msra.mxu0 0.0
  %100 = vmatprep.subr.mxu0 0.0
  %101 = vmatpush1.msra.mxu0 0.0
  %102 = vmatprep.subr.mxu0 0.0
  %103 = vmatpush1.msra.mxu0 %v70
  %104 = vmatprep.subr.mxu0 0.0
  %105 = vmatpush2.msra.mxu0 0.0
  %106 = vmatprep.subr.mxu0 0.0
  %107 = vmatpush2.msra.mxu0 0.0
  %108 = vmatprep.subr.mxu0 0.0
  %109 = vmatpush2.msra.mxu0 0.0
  %110 = vmatprep.subr.mxu0 0.0
  %111 = vmatpush2.msra.mxu0 0.0
  %112 = vmatprep.subr.mxu0 0.0
  %113 = vmatpush2.msra.mxu0 0.0
  %114 = vmatprep.subr.mxu0 0.0
  %115 = vmatpush2.msra.mxu0 0.0
  %116 = vmatprep.subr.mxu0 0.0
  %117 = vmatpush2.msra.mxu0 0.0
  %118 = vmatprep.subr.mxu0 0.0
  %119 = vmatpush2.msra.mxu0 0.0
  %120 = vmatprep.subr.mxu0 0.0
  %121 = vmatpush2.msra.mxu0 0.0
  %122 = vmatprep.subr.mxu0 0.0
  %123 = vmatpush2.msra.mxu0 0.0
  %124 = vmatprep.subr.mxu0 0.0
  %125 = vmatpush2.msra.mxu0 0.0
  %126 = vmatprep.subr.mxu0 0.0
  %127 = vmatpush2.msra.mxu0 0.0
  %128 = vmatprep.subr.mxu0 0.0
  %129 = vmatpush2.msra.mxu0 0.0
  %130 = vmatprep.subr.mxu0 0.0
  %131 = vmatpush2.msra.mxu0 0.0
  %132 = vmatprep.subr.mxu0 0.0
  %133 = vmatpush2.msra.mxu0 0.0
  %134 = vmatprep.subr.mxu0 0.0
  %135 = vmatpush2.msra.mxu0 0.0
  %136 = vmatprep.mubr.f32.mxu0 0.0
  %137 = vmatmul.mubr.f32.gmra.mxu0 %v57
  %v138 = vpop.f32.mrf.mxu0
  %v139 = vadd.f32 %v38, %v138
  %v140 = vpop.f32.mrf.mxu0
  %141 = vmatprep.mubr.f32.mxu0 0.0
  %142 = vmatmul.mubr.f32.gmra.mxu0 %v60
  %v143 = vpop.f32.mrf.mxu0
  %v144 = vadd.f32 %v43, %v143
  %v145 = vpop.f32.mrf.mxu0
  %146 = vmatprep.mubr.f32.mxu0 0.0
  %147 = vmatmul.mubr.f32.gmra.mxu0 %v63
  %v148 = vpop.f32.mrf.mxu0
  %v149 = vadd.f32 %v48, %v148
  %v150 = vpop.f32.mrf.mxu0
  %151 = vmatprep.mubr.f32.mxu0 0.0
  %152 = vmatmul.mubr.f32.gmra.mxu0 %v66
  %v153 = vpop.f32.mrf.mxu0
  %v154 = vadd.f32 %v53, %v153
  %v155 = vpop.f32.mrf.mxu0
  %156 = vdwg.mxu0
  %v157 = vtanh.pop %v139
  %v158 = vtanh.pop %v144
  %v159 = vtanh.pop %v149
  %v160 = vtanh.pop %v154
  %v161 = vld [vmem:[%s3] sm:$0xff]
  %v162 = vld [vmem:[%s3 + $0x8] sm:$0xff]
  %v163 = vld [vmem:[%s3 + $0x10] sm:$0xff]
  %v164 = vld [vmem:[%s3 + $0x18] sm:$0xff]
  %v165 = vld [vmem:[%s4] sm:$0xff]
  %v166 = vld [vmem:[%s4 + $0x8] sm:$0xff]
  %v167 = vld [vmem:[%s4 + $0x10] sm:$0xff]
  %v168 = vld [vmem:[%s4 + $0x18] sm:$0xff]
  %170 = vset.pattern.permute.xlu0 0
  %171 = vperm.xlu0 %170, %v165
  %v172 = vpop.permute.xlu0 %171
  %175 = vset.pattern.permute.xlu0 0
  %176 = vperm.xlu0 %175, %v166
  %v177 = vpop.permute.xlu0 %176
  %180 = vset.pattern.permute.xlu0 0
  %181 = vperm.xlu0 %180, %v167
  %v182 = vpop.permute.xlu0 %181
  %185 = vset.pattern.permute.xlu0 0
  %186 = vperm.xlu0 %185, %v168
  %v187 = vpop.permute.xlu0 %186
  %vm189 = vcmask 261120
  %v191 = vsel %vm189, %v161, 0
  %v194 = vsel %vm189, %v162, 0
  %v197 = vsel %vm189, %v163, 0
  %v200 = vsel %vm189, %v164, 0
  %202 = vmatprep.subr.mxu0 0.0
  %203 = vmatpush1.msra.mxu0 0.0
  %204 = vmatprep.subr.mxu0 0.0
  %205 = vmatpush1.msra.mxu0 0.0
  %206 = vmatprep.subr.mxu0 0.0
  %207 = vmatpush1.msra.mxu0 0.0
  %208 = vmatprep.subr.mxu0 0.0
  %209 = vmatpush1.msra.mxu0 0.0
  %210 = vmatprep.subr.mxu0 0.0
  %211 = vmatpush1.msra.mxu0 0.0
  %212 = vmatprep.subr.mxu0 0.0
  %213 = vmatpush1.msra.mxu0 0.0
  %214 = vmatprep.subr.mxu0 0.0
  %215 = vmatpush1.msra.mxu0 0.0
  %216 = vmatprep.subr.mxu0 0.0
  %217 = vmatpush1.msra.mxu0 0.0
  %218 = vmatprep.subr.mxu0 0.0
  %219 = vmatpush1.msra.mxu0 0.0
  %220 = vmatprep.subr.mxu0 0.0
  %221 = vmatpush1.msra.mxu0 0.0
  %222 = vmatprep.subr.mxu0 0.0
  %223 = vmatpush1.msra.mxu0 0.0
  %224 = vmatprep.subr.mxu0 0.0
  %225 = vmatpush1.msra.mxu0 0.0
  %226 = vmatprep.subr.mxu0 0.0
  %227 = vmatpush1.msra.mxu0 %v160
  %228 = vmatprep.subr.mxu0 0.0
  %229 = vmatpush1.msra.mxu0 %v159
  %230 = vmatprep.subr.mxu0 0.0
  %231 = vmatpush1.msra.mxu0 %v158
  %232 = vmatprep.subr.mxu0 0.0
  %233 = vmatpush1.msra.mxu0 %v157
  %234 = vmatprep.subr.mxu0 0.0
  %235 = vmatpush2.msra.mxu0 0.0
  %236 = vmatprep.subr.mxu0 0.0
  %237 = vmatpush2.msra.mxu0 0.0
  %238 = vmatprep.subr.mxu0 0.0
  %239 = vmatpush2.msra.mxu0 0.0
  %240 = vmatprep.subr.mxu0 0.0
  %241 = vmatpush2.msra.mxu0 0.0
  %242 = vmatprep.subr.mxu0 0.0
  %243 = vmatpush2.msra.mxu0 0.0
  %244 = vmatprep.subr.mxu0 0.0
  %245 = vmatpush2.msra.mxu0 0.0
  %246 = vmatprep.subr.mxu0 0.0
  %247 = vmatpush2.msra.mxu0 0.0
  %248 = vmatprep.subr.mxu0 0.0
  %249 = vmatpush2.msra.mxu0 0.0
  %250 = vmatprep.subr.mxu0 0.0
  %251 = vmatpush2.msra.mxu0 0.0
  %252 = vmatprep.subr.mxu0 0.0
  %253 = vmatpush2.msra.mxu0 0.0
  %254 = vmatprep.subr.mxu0 0.0
  %255 = vmatpush2.msra.mxu0 0.0
  %256 = vmatprep.subr.mxu0 0.0
  %257 = vmatpush2.msra.mxu0 0.0
  %258 = vmatprep.subr.mxu0 0.0
  %259 = vmatpush2.msra.mxu0 0.0
  %260 = vmatprep.subr.mxu0 0.0
  %261 = vmatpush2.msra.mxu0 0.0
  %262 = vmatprep.subr.mxu0 0.0
  %263 = vmatpush2.msra.mxu0 0.0
  %264 = vmatprep.subr.mxu0 0.0
  %265 = vmatpush2.msra.mxu0 0.0
  %266 = vmatprep.mubr.f32.mxu0 0.0
  %267 = vmatmul.mubr.f32.gmra.mxu0 %v191
  %v268 = vpop.f32.mrf.mxu0
  %v269 = vadd.f32 %v172, %v268
  %v270 = vpop.f32.mrf.mxu0
  %271 = vmatprep.mubr.f32.mxu0 0.0
  %272 = vmatmul.mubr.f32.gmra.mxu0 %v194
  %v273 = vpop.f32.mrf.mxu0
  %v274 = vadd.f32 %v177, %v273
  %v275 = vpop.f32.mrf.mxu0
  %276 = vmatprep.mubr.f32.mxu0 0.0
  %277 = vmatmul.mubr.f32.gmra.mxu0 %v197
  %v278 = vpop.f32.mrf.mxu0
  %v279 = vadd.f32 %v182, %v278
  %v280 = vpop.f32.mrf.mxu0
  %281 = vmatprep.mubr.f32.mxu0 0.0
  %282 = vmatmul.mubr.f32.gmra.mxu0 %v200
  %v283 = vpop.f32.mrf.mxu0
  %v284 = vadd.f32 %v187, %v283
  %v285 = vpop.f32.mrf.mxu0
  %286 = vdwg.mxu0
  %v287 = vtanh.pop %v269
  %v288 = vtanh.pop %v274
  %v289 = vtanh.pop %v279
  %v290 = vtanh.pop %v284
  %v291 = vld [vmem:[%s5] sm:$0xf]
  %v292 = vld [vmem:[%s6] sm:$0xf]
  %294 = vset.pattern.permute.xlu0 0
  %295 = vperm.xlu0 %294, %v292
  %v296 = vpop.permute.xlu0 %295
  %v299 = vsel %vm189, %v291, 0
  %301 = vmatprep.subr.mxu0 0.0
  %302 = vmatpush1.msra.mxu0 0.0
  %303 = vmatprep.subr.mxu0 0.0
  %304 = vmatpush1.msra.mxu0 0.0
  %305 = vmatprep.subr.mxu0 0.0
  %306 = vmatpush1.msra.mxu0 0.0
  %307 = vmatprep.subr.mxu0 0.0
  %308 = vmatpush1.msra.mxu0 0.0
  %309 = vmatprep.subr.mxu0 0.0
  %310 = vmatpush1.msra.mxu0 0.0
  %311 = vmatprep.subr.mxu0 0.0
  %312 = vmatpush1.msra.mxu0 0.0
  %313 = vmatprep.subr.mxu0 0.0
  %314 = vmatpush1.msra.mxu0 0.0
  %315 = vmatprep.subr.mxu0 0.0
  %316 = vmatpush1.msra.mxu0 0.0
  %317 = vmatprep.subr.mxu0 0.0
  %318 = vmatpush1.msra.mxu0 0.0
  %319 = vmatprep.subr.mxu0 0.0
  %320 = vmatpush1.msra.mxu0 0.0
  %321 = vmatprep.subr.mxu0 0.0
  %322 = vmatpush1.msra.mxu0 0.0
  %323 = vmatprep.subr.mxu0 0.0
  %324 = vmatpush1.msra.mxu0 0.0
  %325 = vmatprep.subr.mxu0 0.0
  %326 = vmatpush1.msra.mxu0 %v290
  %327 = vmatprep.subr.mxu0 0.0
  %328 = vmatpush1.msra.mxu0 %v289
  %329 = vmatprep.subr.mxu0 0.0
  %330 = vmatpush1.msra.mxu0 %v288
  %331 = vmatprep.subr.mxu0 0.0
  %332 = vmatpush1.msra.mxu0 %v287
  %333 = vmatprep.subr.mxu0 0.0
  %334 = vmatpush2.msra.mxu0 0.0
  %335 = vmatprep.subr.mxu0 0.0
  %336 = vmatpush2.msra.mxu0 0.0
  %337 = vmatprep.subr.mxu0 0.0
  %338 = vmatpush2.msra.mxu0 0.0
  %339 = vmatprep.subr.mxu0 0.0
  %340 = vmatpush2.msra.mxu0 0.0
  %341 = vmatprep.subr.mxu0 0.0
  %342 = vmatpush2.msra.mxu0 0.0
  %343 = vmatprep.subr.mxu0 0.0
  %344 = vmatpush2.msra.mxu0 0.0
  %345 = vmatprep.subr.mxu0 0.0
  %346 = vmatpush2.msra.mxu0 0.0
  %347 = vmatprep.subr.mxu0 0.0
  %348 = vmatpush2.msra.mxu0 0.0
  %349 = vmatprep.subr.mxu0 0.0
  %350 = vmatpush2.msra.mxu0 0.0
  %351 = vmatprep.subr.mxu0 0.0
  %352 = vmatpush2.msra.mxu0 0.0
  %353 = vmatprep.subr.mxu0 0.0
  %354 = vmatpush2.msra.mxu0 0.0
  %355 = vmatprep.subr.mxu0 0.0
  %356 = vmatpush2.msra.mxu0 0.0
  %357 = vmatprep.subr.mxu0 0.0
  %358 = vmatpush2.msra.mxu0 0.0
  %359 = vmatprep.subr.mxu0 0.0
  %360 = vmatpush2.msra.mxu0 0.0
  %361 = vmatprep.subr.mxu0 0.0
  %362 = vmatpush2.msra.mxu0 0.0
  %363 = vmatprep.subr.mxu0 0.0
  %364 = vmatpush2.msra.mxu0 0.0
  %365 = vmatprep.mubr.f32.mxu0 0.0
  %366 = vmatmul.mubr.f32.gmra.mxu0 %v299
  %v367 = vpop.f32.mrf.mxu0
  %v368 = vadd.f32 %v296, %v367
  %v369 = vpop.f32.mrf.mxu0
  %370 = vdwg.mxu0
  %371 = vst [vmem:[%s7] sm:$0xf] %v368
  // Predicated region
  $region30: #{mlp_forward.1} parent=0 // pred_check
    _
  $region31: #{mlp_forward.1} parent=0 // pred_check_branch
    %373 = sbr.rel (0) target = $region33
  $region32: #{mlp_forward.1} parent=0 // pred_region
    _
  $region33: #{mlp_forward.1} parent=0 // pred_fallthru
    _
  // Predicated region
  $region34: #{mlp_forward.1} parent=0 // pred_check
    _
  $region35: #{mlp_forward.1} parent=0 // pred_check_branch
    %375 = sbr.rel (0) target = $region37
  $region36: #{mlp_forward.1} parent=0 // pred_region
    _
  $region37: #{mlp_forward.1} parent=0 // pred_fallthru
    _

</llo_original>
